<compile_context>
chip_gen: v7x
topology: tpu7x:2x2x1
jax: 0.10.0
libtpu: 0.0.40
codegen_flags: <defaults>
</compile_context>

<pallas_src>
import functools
import math

import jax
import jax.numpy as jnp
from jax.experimental import pallas as pl
from jax.experimental.pallas import tpu as pltpu


def _round_up(x, m):
    return (x + m - 1) // m * m


def _arcface_kernel(pred_ref,            # (tile_b, D) VMEM, original dtype
                    wn_ref,              # (D, tile_c) VMEM, pre-normalized mxu_dtype
                    tgt_ref,             # (tile_b, 1) VMEM, int32
                    out_ref,             # (1, 1, 1) VMEM   (per-B-tile loss sum)
                    pred_n_s,            # (tile_b, D) mxu_dtype scratch
                    m_s, l_s, t_s,       # (tile_b, 1) f32 scratch (online LSE)
                    *, scale, cos_m, sin_m, th, mm,
                    valid_b, valid_c, tile_b, tile_c, c_has_pad, mxu_dtype):
    b_idx = pl.program_id(0)
    c_idx = pl.program_id(1)
    neg_big = jnp.float32(-1e30)

    # ---- per-B-tile init: runs once, at the first C tile -------------------
    @pl.when(c_idx == 0)
    def _init():
        # L2-normalize pred rows once per B tile (f32 math, rsqrt not divide),
        # cache in the MXU feed dtype so the cosine matmul never re-does it.
        p = pred_ref[...].astype(jnp.float32)
        ssq = jnp.sum(p * p, axis=1, keepdims=True)
        pred_n_s[...] = (p * jax.lax.rsqrt(jnp.maximum(ssq, 1e-24))).astype(mxu_dtype)

        m_s[...] = jnp.full((tile_b, 1), neg_big, jnp.float32)
        l_s[...] = jnp.zeros((tile_b, 1), jnp.float32)
        t_s[...] = jnp.zeros((tile_b, 1), jnp.float32)

    # ---- this C tile: cosine matmul on the MXU (weights already normalized) -
    cosine = jnp.dot(pred_n_s[...], wn_ref[...],
                     preferred_element_type=jnp.float32)        # (tile_b, tile_c)

    tgt = tgt_ref[...]                                          # (tile_b, 1) int32
    col_ids = c_idx * tile_c + jax.lax.broadcasted_iota(
        jnp.int32, (tile_b, tile_c), 1)
    is_tgt = col_ids == tgt                                     # bool mask slab

    # ---- margin math only on the per-row target cosine (B values) ----------
    # cos_t is 0 when the target is not in this C tile; the result is unused
    # in that case (both the logit select and t_s accumulation are gated).
    cos_t = jnp.sum(jnp.where(is_tgt, cosine, 0.0), axis=1, keepdims=True)
    sin_t = jnp.sqrt(jnp.clip(1.0 - cos_t * cos_t, 0.0, 1.0))
    phi = cos_t * cos_m - sin_t * sin_m
    phi = jnp.where(cos_t - th > 0, phi, cos_t - mm)

    # logits = scale * cosine, with the target entry replaced by scale * phi.
    logits = scale * jnp.where(is_tgt, phi, cosine)
    if c_has_pad:  # static: only emitted when C % tile_c != 0
        logits = jnp.where(col_ids < valid_c, logits, neg_big)

    # ---- online logsumexp accumulation across C tiles -----------------------
    m_prev = m_s[...]
    m_new = jnp.maximum(m_prev, jnp.max(logits, axis=1, keepdims=True))
    alpha = jnp.exp(m_prev - m_new)
    l_s[...] = l_s[...] * alpha + jnp.sum(jnp.exp(logits - m_new),
                                          axis=1, keepdims=True)
    m_s[...] = m_new

    # Target logit = scale * phi, accumulated only when the target class id
    # falls inside this C tile (per-row scalar work, no slab reduce).
    in_tile = (tgt >= c_idx * tile_c) & (tgt < (c_idx + 1) * tile_c)
    t_s[...] = t_s[...] + jnp.where(in_tile, scale * phi, 0.0)

    # ---- finalize: per-row CE, mask padded rows, write partial sum ----------
    @pl.when(c_idx == pl.num_programs(1) - 1)
    def _finalize():
        row_ids = jax.lax.broadcasted_iota(jnp.int32, (tile_b, 1), 0)
        row_valid = (b_idx * tile_b + row_ids) < valid_b
        per_row = m_s[...] + jnp.log(l_s[...]) - t_s[...]
        per_row = jnp.where(row_valid, per_row, 0.0)
        total = jnp.sum(per_row, axis=0, keepdims=True)           # (1, 1)
        out_ref[...] = total.reshape(1, 1, 1)


def arcface_loss(pred, target, weights, *, scale=64.0, margin=0.5,
                 block_b=256, block_c=512, mxu_dtype=jnp.bfloat16,
                 weight_buffer_count=2):
    """ArcFace loss (mean cross-entropy) with a Pallas TPU kernel.

    pred:    (B, D) features, weights: (C, D) (PyTorch nn.Linear layout),
    target:  (B,) int class ids.  Returns a scalar f32 loss.

    Weights are L2-normalized / transposed / bf16-cast once here and streamed
    to the kernel as (D, C_pad).  VMEM sizing: 2 x (D * block_c * 2B) weight
    buffers + ~2 live (block_b, block_c) f32 slabs + pred block + bf16 pred
    scratch.  Defaults (256, 512) fit the 32 MiB default scoped VMEM on every
    generation (incl. v7x's 64 MiB physical).  On v5e set
    weight_buffer_count=3 if the weight DMA is still exposed.
    """
    B, D = pred.shape
    C, D2 = weights.shape
    assert D == D2

    # tile_b multiple of 16: the cached normalized pred is bf16 (2 rows/sublane)
    tile_b = _round_up(min(block_b, _round_up(B, 16)), 16)
    tile_c = _round_up(min(block_c, _round_up(C, 128)), 128)
    b_pad = _round_up(B, tile_b)
    c_pad = _round_up(C, tile_c)
    nb, nc = b_pad // tile_b, c_pad // tile_c

    pred_p = jnp.pad(pred, ((0, b_pad - B), (0, 0)))
    tgt_p = jnp.pad(target.astype(jnp.int32), (0, b_pad - B)).reshape(b_pad, 1)

    # Pre-normalize weight rows (class vectors), cast to the MXU feed dtype,
    # transpose to (D, C) so C is lane-dense, pad the class axis.
    w32 = weights.astype(jnp.float32)
    wssq = jnp.sum(w32 * w32, axis=1, keepdims=True)
    w_n = (w32 * jax.lax.rsqrt(jnp.maximum(wssq, 1e-24))).astype(mxu_dtype)
    w_n_t = jnp.pad(w_n.T, ((0, 0), (0, c_pad - C)))             # (D, C_pad)

    kernel = functools.partial(
        _arcface_kernel,
        scale=float(scale),
        cos_m=math.cos(margin), sin_m=math.sin(margin),
        th=math.cos(math.pi - margin),
        mm=math.sin(math.pi - margin) * margin,
        valid_b=B, valid_c=C, tile_b=tile_b, tile_c=tile_c,
        c_has_pad=(c_pad != C), mxu_dtype=mxu_dtype)

    if weight_buffer_count == 2:
        w_spec = pl.BlockSpec((D, tile_c), lambda b, c: (0, c))
    else:  # deeper pipelining of the weight stream (v5e, exposed DMA)
        w_spec = pl.BlockSpec((D, tile_c), lambda b, c: (0, c),
                              pipeline_mode=pl.Buffered(weight_buffer_count))

    grid_spec = pltpu.PrefetchScalarGridSpec(
        num_scalar_prefetch=0,
        grid=(nb, nc),
        in_specs=[
            pl.BlockSpec((tile_b, D), lambda b, c: (b, 0)),      # pred
            w_spec,                                              # normalized W^T
            pl.BlockSpec((tile_b, 1), lambda b, c: (b, 0)),      # target ids
        ],
        out_specs=pl.BlockSpec((1, 1, 1), lambda b, c: (b, 0, 0)),
        scratch_shapes=[
            pltpu.VMEM((tile_b, D), mxu_dtype),    # cached normalized pred
            pltpu.VMEM((tile_b, 1), jnp.float32),  # running max
            pltpu.VMEM((tile_b, 1), jnp.float32),  # running sum
            pltpu.VMEM((tile_b, 1), jnp.float32),  # running target logit
        ],
    )

    w_bytes = jnp.dtype(mxu_dtype).itemsize
    p_bytes = jnp.dtype(pred.dtype).itemsize
    cost = pl.CostEstimate(
        flops=2 * b_pad * c_pad * D,
        transcendentals=b_pad * c_pad + 4 * b_pad * nc,
        bytes_accessed=(b_pad * D * p_bytes            # pred, streamed once
                        + nb * D * c_pad * w_bytes     # weights, streamed nb times
                        + b_pad * 4                    # targets
                        + nb * 4))                     # partial outputs

    partials = pl.pallas_call(
        kernel,
        out_shape=jax.ShapeDtypeStruct((nb, 1, 1), jnp.float32),
        grid_spec=grid_spec,
        compiler_params=pltpu.CompilerParams(
            dimension_semantics=("parallel", "arbitrary")),
        cost_estimate=cost,
    )(pred_p, w_n_t, tgt_p)

    return jnp.sum(partials) / jnp.float32(B)


if __name__ == "__main__":
    in_classes = 18
    out_classes = 18
    batch = 4
    scale, margin = 64.0, 0.5

    key = jax.random.PRNGKey(0)
    k_pred, k_tgt, k_w = jax.random.split(key, 3)

    pred = jax.random.normal(k_pred, (batch, in_classes), dtype=jnp.float32)
    target = jax.random.randint(k_tgt, (batch,), 0, out_classes, dtype=jnp.int32)

    # Deterministic xavier_uniform_ init for weights (out_classes, in_classes)
    bound = math.sqrt(6.0 / (in_classes + out_classes))
    weights = jax.random.uniform(
        k_w, (out_classes, in_classes), dtype=jnp.float32,
        minval=-bound, maxval=bound)

    loss = arcface_loss(pred, target, weights, scale=scale, margin=margin)
    jax.block_until_ready(loss)

    # Pure-JAX reference (optionally mimicking the kernel's bf16 MXU feed).
    def ref(pred, target, weights, scale, margin, mxu_dtype=None):
        eps = 1e-12
        pn = pred / jnp.maximum(jnp.linalg.norm(pred, axis=1, keepdims=True), eps)
        wn = weights / jnp.maximum(
            jnp.linalg.norm(weights, axis=1, keepdims=True), eps)
        if mxu_dtype is not None:
            pn = pn.astype(mxu_dtype).astype(jnp.float32)
            wn = wn.astype(mxu_dtype).astype(jnp.float32)
        cosine = pn @ wn.T
        sine = jnp.sqrt(jnp.clip(1.0 - cosine ** 2, 0.0, 1.0))
        cos_m, sin_m = math.cos(margin), math.sin(margin)
        th = math.cos(math.pi - margin)
        mm = math.sin(math.pi - margin) * margin
        phi = cosine * cos_m - sine * sin_m
        phi = jnp.where(cosine - th > 0, phi, cosine - mm)
        one_hot = jax.nn.one_hot(target, cosine.shape[1], dtype=jnp.float32)
        logits = (one_hot * phi + (1.0 - one_hot) * cosine) * scale
        logp = jax.nn.log_softmax(logits, axis=1)
        return -jnp.mean(jnp.sum(one_hot * logp, axis=1))

    # Tight check vs. a reference using the same bf16-rounded MXU operands.
    ref_bf16 = ref(pred, target, weights, scale, margin, mxu_dtype=jnp.bfloat16)
    assert jnp.allclose(loss, ref_bf16, rtol=1e-3, atol=1e-3), (loss, ref_bf16)

    # Loose check vs. the exact f32 PyTorch-equivalent reference
    # (difference is only the bf16 MXU feed).
    ref_f32 = ref(pred, target, weights, scale, margin)
    assert jnp.allclose(loss, ref_f32, rtol=3e-2, atol=3e-1), (loss, ref_f32)

    print("KERNEL_OK")
</pallas_src>

<mosaic_0001>
module attributes {stable_mosaic.version = 11 : i64} {
  func.func @_arcface_kernel(%arg0: i32, %arg1: i32, %arg2: memref<16x18xf32, #tpu.memory_space<vmem>>, %arg3: memref<18x128xbf16, #tpu.memory_space<vmem>>, %arg4: memref<16x1xi32, #tpu.memory_space<vmem>>, %arg5: memref<1x1x1xf32, #tpu.memory_space<vmem>>, %arg6: memref<16x18xbf16, #tpu.memory_space<vmem>>, %arg7: memref<16x1xf32, #tpu.memory_space<vmem>>, %arg8: memref<16x1xf32, #tpu.memory_space<vmem>>, %arg9: memref<16x1xf32, #tpu.memory_space<vmem>>) attributes {dimension_semantics = [#tpu.dimension_semantics<parallel>, #tpu.dimension_semantics<arbitrary>], iteration_bounds = array<i64: 1, 1>, scalar_prefetch = 0 : i64, scratch_operands = 4 : i64, tpu.core_type = #tpu.core_type<tc>, window_params = [{transform_indices = @transform_0, window_bounds = array<i64: 16, 18>}, {transform_indices = @transform_1, window_bounds = array<i64: 18, 128>}, {transform_indices = @transform_2, window_bounds = array<i64: 16, 1>}, {transform_indices = @transform_3, window_bounds = array<i64: 1, 1, 1>}]} {
    %c0_i32 = arith.constant 0 : i32
    %0 = arith.cmpi eq, %arg1, %c0_i32 : i32
    %1 = arith.extui %0 : i1 to i32
    %cst = arith.constant -1.000000e+30 : f32
    %c0_i32_0 = arith.constant 0 : i32
    %2 = arith.cmpi ne, %1, %c0_i32_0 : i32
    scf.if %2 {
      %c0_39 = arith.constant 0 : index
      %c0_40 = arith.constant 0 : index
      %80 = vector.load %arg2[%c0_39, %c0_40] : memref<16x18xf32, #tpu.memory_space<vmem>>, vector<16x18xf32>
      %81 = arith.mulf %80, %80 : vector<16x18xf32>
      %cst_41 = arith.constant dense<0.000000e+00> : vector<16xf32>
      %82 = vector.multi_reduction <add>, %81, %cst_41 [1] : vector<16x18xf32> to vector<16xf32>
      %83 = vector.shape_cast %82 : vector<16xf32> to vector<16x1xf32>
      %cst_42 = arith.constant 1.000000e-24 : f32
      %84 = vector.broadcast %cst_42 : f32 to vector<16x1xf32>
      %85 = arith.maximumf %83, %84 : vector<16x1xf32>
      %86 = math.rsqrt %85 : vector<16x1xf32>
      %87 = vector.broadcast %86 : vector<16x1xf32> to vector<16x18xf32>
      %88 = arith.mulf %80, %87 : vector<16x18xf32>
      %89 = arith.truncf %88 : vector<16x18xf32> to vector<16x18xbf16>
      %c0_43 = arith.constant 0 : index
      %c0_44 = arith.constant 0 : index
      %90 = vector.load %arg6[%c0_43, %c0_44] : memref<16x18xbf16, #tpu.memory_space<vmem>>, vector<16x18xbf16>
      tpu.vector_store %arg6[%c0_43, %c0_44], %89 {strides = array<i32>} : memref<16x18xbf16, #tpu.memory_space<vmem>>, vector<16x18xbf16>,
      %91 = vector.broadcast %cst : f32 to vector<16x1xf32>
      %c0_45 = arith.constant 0 : index
      %c0_46 = arith.constant 0 : index
      %92 = vector.load %arg7[%c0_45, %c0_46] : memref<16x1xf32, #tpu.memory_space<vmem>>, vector<16x1xf32>
      tpu.vector_store %arg7[%c0_45, %c0_46], %91 {strides = array<i32>} : memref<16x1xf32, #tpu.memory_space<vmem>>, vector<16x1xf32>,
      %cst_47 = arith.constant 0.000000e+00 : f32
      %93 = vector.broadcast %cst_47 : f32 to vector<16x1xf32>
      %c0_48 = arith.constant 0 : index
      %c0_49 = arith.constant 0 : index
      %94 = vector.load %arg8[%c0_48, %c0_49] : memref<16x1xf32, #tpu.memory_space<vmem>>, vector<16x1xf32>
      tpu.vector_store %arg8[%c0_48, %c0_49], %93 {strides = array<i32>} : memref<16x1xf32, #tpu.memory_space<vmem>>, vector<16x1xf32>,
      %cst_50 = arith.constant 0.000000e+00 : f32
      %95 = vector.broadcast %cst_50 : f32 to vector<16x1xf32>
      %c0_51 = arith.constant 0 : index
      %c0_52 = arith.constant 0 : index
      %96 = vector.load %arg9[%c0_51, %c0_52] : memref<16x1xf32, #tpu.memory_space<vmem>>, vector<16x1xf32>
      tpu.vector_store %arg9[%c0_51, %c0_52], %95 {strides = array<i32>} : memref<16x1xf32, #tpu.memory_space<vmem>>, vector<16x1xf32>,
    } else {
    }
    %c0 = arith.constant 0 : index
    %c0_1 = arith.constant 0 : index
    %3 = vector.load %arg6[%c0, %c0_1] : memref<16x18xbf16, #tpu.memory_space<vmem>>, vector<16x18xbf16>
    %c0_2 = arith.constant 0 : index
    %c0_3 = arith.constant 0 : index
    %4 = vector.load %arg3[%c0_2, %c0_3] : memref<18x128xbf16, #tpu.memory_space<vmem>>, vector<18x128xbf16>
    %cst_4 = arith.constant dense<0.000000e+00> : vector<16x128xf32>
    %5 = tpu.matmul %3, %4, %cst_4 {dimension_numbers = #tpu.dot_dimension_numbers<[1], [0], [0], [1], [0, 0, 1, 1], [], []>} : vector<16x18xbf16>, vector<18x128xbf16>, vector<16x128xf32> -> vector<16x128xf32>
    %c0_5 = arith.constant 0 : index
    %c0_6 = arith.constant 0 : index
    %6 = vector.load %arg4[%c0_5, %c0_6] : memref<16x1xi32, #tpu.memory_space<vmem>>, vector<16x1xi32>
    %c128_i32 = arith.constant 128 : i32
    %7 = arith.muli %arg1, %c128_i32 : i32
    %8 = tpu.iota {dimensions = array<i32: 1>} : vector<16x128xi32>
    %9 = vector.broadcast %7 : i32 to vector<16x128xi32>
    %10 = arith.addi %9, %8 : vector<16x128xi32>
    %11 = vector.broadcast %6 : vector<16x1xi32> to vector<16x128xi32>
    %12 = arith.cmpi eq, %10, %11 : vector<16x128xi32>
    %cst_7 = arith.constant 0.000000e+00 : f32
    %13 = vector.broadcast %cst_7 : f32 to vector<16x128xf32>
    %14 = arith.select %12, %5, %13 : vector<16x128xi1>, vector<16x128xf32>
    %cst_8 = arith.constant dense<0.000000e+00> : vector<16xf32>
    %15 = vector.multi_reduction <add>, %14, %cst_8 [1] : vector<16x128xf32> to vector<16xf32>
    %16 = vector.shape_cast %15 : vector<16xf32> to vector<16x1xf32>
    %17 = arith.mulf %16, %16 : vector<16x1xf32>
    %cst_9 = arith.constant 1.000000e+00 : f32
    %18 = vector.broadcast %cst_9 : f32 to vector<16x1xf32>
    %19 = arith.subf %18, %17 : vector<16x1xf32>
    %cst_10 = arith.constant 0.000000e+00 : f32
    %cst_11 = arith.constant 1.000000e+00 : f32
    %20 = vector.broadcast %cst_10 : f32 to vector<16x1xf32>
    %21 = arith.maximumf %20, %19 : vector<16x1xf32>
    %22 = vector.broadcast %cst_11 : f32 to vector<16x1xf32>
    %23 = arith.minimumf %22, %21 : vector<16x1xf32>
    %24 = math.sqrt %23 : vector<16x1xf32>
    %cst_12 = arith.constant 0.87758255 : f32
    %25 = vector.broadcast %cst_12 : f32 to vector<16x1xf32>
    %26 = arith.mulf %16, %25 : vector<16x1xf32>
    %cst_13 = arith.constant 0.47942555 : f32
    %27 = vector.broadcast %cst_13 : f32 to vector<16x1xf32>
    %28 = arith.mulf %24, %27 : vector<16x1xf32>
    %29 = arith.subf %26, %28 : vector<16x1xf32>
    %cst_14 = arith.constant -0.87758255 : f32
    %30 = vector.broadcast %cst_14 : f32 to vector<16x1xf32>
    %31 = arith.subf %16, %30 : vector<16x1xf32>
    %cst_15 = arith.constant 0.000000e+00 : f32
    %32 = vector.broadcast %cst_15 : f32 to vector<16x1xf32>
    %33 = arith.cmpf ogt, %31, %32 : vector<16x1xf32>
    %cst_16 = arith.constant 0.239712775 : f32
    %34 = vector.broadcast %cst_16 : f32 to vector<16x1xf32>
    %35 = arith.subf %16, %34 : vector<16x1xf32>
    %36 = arith.select %33, %29, %35 : vector<16x1xi1>, vector<16x1xf32>
    %37 = vector.shape_cast %36 : vector<16x1xf32> to vector<16x1xf32>
    %38 = vector.broadcast %37 : vector<16x1xf32> to vector<16x128xf32>
    %39 = arith.select %12, %38, %5 : vector<16x128xi1>, vector<16x128xf32>
    %cst_17 = arith.constant 6.400000e+01 : f32
    %40 = vector.broadcast %cst_17 : f32 to vector<16x128xf32>
    %41 = arith.mulf %40, %39 : vector<16x128xf32>
    %c18_i32 = arith.constant 18 : i32
    %42 = vector.broadcast %c18_i32 : i32 to vector<16x128xi32>
    %43 = arith.cmpi slt, %10, %42 : vector<16x128xi32>
    %cst_18 = arith.constant -1.000000e+30 : f32
    %44 = vector.broadcast %cst_18 : f32 to vector<16x128xf32>
    %45 = arith.select %43, %41, %44 : vector<16x128xi1>, vector<16x128xf32>
    %c0_19 = arith.constant 0 : index
    %c0_20 = arith.constant 0 : index
    %46 = vector.load %arg7[%c0_19, %c0_20] : memref<16x1xf32, #tpu.memory_space<vmem>>, vector<16x1xf32>
    %cst_21 = arith.constant dense<0xFF800000> : vector<16xf32>
    %47 = vector.multi_reduction <maximumf>, %45, %cst_21 [1] : vector<16x128xf32> to vector<16xf32>
    %48 = vector.shape_cast %47 : vector<16xf32> to vector<16x1xf32>
    %49 = arith.maximumf %46, %48 : vector<16x1xf32>
    %50 = arith.subf %46, %49 : vector<16x1xf32>
    %51 = math.exp %50 : vector<16x1xf32>
    %c0_22 = arith.constant 0 : index
    %c0_23 = arith.constant 0 : index
    %52 = vector.load %arg8[%c0_22, %c0_23] : memref<16x1xf32, #tpu.memory_space<vmem>>, vector<16x1xf32>
    %53 = arith.mulf %52, %51 : vector<16x1xf32>
    %54 = vector.broadcast %49 : vector<16x1xf32> to vector<16x128xf32>
    %55 = arith.subf %45, %54 : vector<16x128xf32>
    %56 = math.exp %55 : vector<16x128xf32>
    %cst_24 = arith.constant dense<0.000000e+00> : vector<16xf32>
    %57 = vector.multi_reduction <add>, %56, %cst_24 [1] : vector<16x128xf32> to vector<16xf32>
    %58 = vector.shape_cast %57 : vector<16xf32> to vector<16x1xf32>
    %59 = arith.addf %53, %58 : vector<16x1xf32>
    %c0_25 = arith.constant 0 : index
    %c0_26 = arith.constant 0 : index
    %60 = vector.load %arg8[%c0_25, %c0_26] : memref<16x1xf32, #tpu.memory_space<vmem>>, vector<16x1xf32>
    tpu.vector_store %arg8[%c0_25, %c0_26], %59 {strides = array<i32>} : memref<16x1xf32, #tpu.memory_space<vmem>>, vector<16x1xf32>,
    %c0_27 = arith.constant 0 : index
    %c0_28 = arith.constant 0 : index
    %61 = vector.load %arg7[%c0_27, %c0_28] : memref<16x1xf32, #tpu.memory_space<vmem>>, vector<16x1xf32>
    tpu.vector_store %arg7[%c0_27, %c0_28], %49 {strides = array<i32>} : memref<16x1xf32, #tpu.memory_space<vmem>>, vector<16x1xf32>,
    %c128_i32_29 = arith.constant 128 : i32
    %62 = arith.muli %arg1, %c128_i32_29 : i32
    %63 = vector.broadcast %62 : i32 to vector<16x1xi32>
    %64 = arith.cmpi sge, %6, %63 : vector<16x1xi32>
    %c1_i32 = arith.constant 1 : i32
    %65 = arith.addi %arg1, %c1_i32 : i32
    %c128_i32_30 = arith.constant 128 : i32
    %66 = arith.muli %65, %c128_i32_30 : i32
    %67 = vector.broadcast %66 : i32 to vector<16x1xi32>
    %68 = arith.cmpi slt, %6, %67 : vector<16x1xi32>
    %69 = arith.andi %64, %68 : vector<16x1xi1>
    %c0_31 = arith.constant 0 : index
    %c0_32 = arith.constant 0 : index
    %70 = vector.load %arg9[%c0_31, %c0_32] : memref<16x1xf32, #tpu.memory_space<vmem>>, vector<16x1xf32>
    %cst_33 = arith.constant 6.400000e+01 : f32
    %71 = vector.broadcast %cst_33 : f32 to vector<16x1xf32>
    %72 = arith.mulf %71, %36 : vector<16x1xf32>
    %cst_34 = arith.constant 0.000000e+00 : f32
    %73 = vector.broadcast %cst_34 : f32 to vector<16x1xf32>
    %74 = arith.select %69, %72, %73 : vector<16x1xi1>, vector<16x1xf32>
    %75 = arith.addf %70, %74 : vector<16x1xf32>
    %c0_35 = arith.constant 0 : index
    %c0_36 = arith.constant 0 : index
    %76 = vector.load %arg9[%c0_35, %c0_36] : memref<16x1xf32, #tpu.memory_space<vmem>>, vector<16x1xf32>
    tpu.vector_store %arg9[%c0_35, %c0_36], %75 {strides = array<i32>} : memref<16x1xf32, #tpu.memory_space<vmem>>, vector<16x1xf32>,
    %c0_i32_37 = arith.constant 0 : i32
    %77 = arith.cmpi eq, %arg1, %c0_i32_37 : i32
    %78 = arith.extui %77 : i1 to i32
    %c0_i32_38 = arith.constant 0 : i32
    %79 = arith.cmpi ne, %78, %c0_i32_38 : i32
    scf.if %79 {
      %80 = tpu.iota {dimensions = array<i32: 0>} : vector<16x1xi32>
      %c16_i32 = arith.constant 16 : i32
      %81 = arith.muli %arg0, %c16_i32 : i32
      %82 = vector.broadcast %81 : i32 to vector<16x1xi32>
      %83 = arith.addi %82, %80 : vector<16x1xi32>
      %c4_i32 = arith.constant 4 : i32
      %84 = vector.broadcast %c4_i32 : i32 to vector<16x1xi32>
      %85 = arith.cmpi slt, %83, %84 : vector<16x1xi32>
      %c0_39 = arith.constant 0 : index
      %c0_40 = arith.constant 0 : index
      %86 = vector.load %arg7[%c0_39, %c0_40] : memref<16x1xf32, #tpu.memory_space<vmem>>, vector<16x1xf32>
      %c0_41 = arith.constant 0 : index
      %c0_42 = arith.constant 0 : index
      %87 = vector.load %arg8[%c0_41, %c0_42] : memref<16x1xf32, #tpu.memory_space<vmem>>, vector<16x1xf32>
      %88 = math.log %87 : vector<16x1xf32>
      %89 = arith.addf %86, %88 : vector<16x1xf32>
      %c0_43 = arith.constant 0 : index
      %c0_44 = arith.constant 0 : index
      %90 = vector.load %arg9[%c0_43, %c0_44] : memref<16x1xf32, #tpu.memory_space<vmem>>, vector<16x1xf32>
      %91 = arith.subf %89, %90 : vector<16x1xf32>
      %cst_45 = arith.constant 0.000000e+00 : f32
      %92 = vector.broadcast %cst_45 : f32 to vector<16x1xf32>
      %93 = arith.select %85, %91, %92 : vector<16x1xi1>, vector<16x1xf32>
      %cst_46 = arith.constant dense<0.000000e+00> : vector<1xf32>
      %94 = vector.multi_reduction <add>, %93, %cst_46 [0] : vector<16x1xf32> to vector<1xf32>
      %95 = vector.shape_cast %94 : vector<1xf32> to vector<1x1xf32>
      %96 = vector.shape_cast %95 : vector<1x1xf32> to vector<1x1x1xf32>
      %c0_47 = arith.constant 0 : index
      %c0_48 = arith.constant 0 : index
      %c0_49 = arith.constant 0 : index
      %97 = vector.load %arg5[%c0_47, %c0_48, %c0_49] : memref<1x1x1xf32, #tpu.memory_space<vmem>>, vector<1x1x1xf32>
      tpu.vector_store %arg5[%c0_47, %c0_48, %c0_49], %96 {strides = array<i32>} : memref<1x1x1xf32, #tpu.memory_space<vmem>>, vector<1x1x1xf32>,
    } else {
    }
    return
  }
  func.func @transform_0(%arg0: i32, %arg1: i32) -> (i32, i32) {
    %c0_i32 = arith.constant 0 : i32
    %c0_i32_0 = arith.constant 0 : i32
    return %arg0, %c0_i32 : i32, i32
  }
  func.func @transform_1(%arg0: i32, %arg1: i32) -> (i32, i32) {
    %c0_i32 = arith.constant 0 : i32
    %c0_i32_0 = arith.constant 0 : i32
    return %c0_i32, %arg1 : i32, i32
  }
  func.func @transform_2(%arg0: i32, %arg1: i32) -> (i32, i32) {
    %c0_i32 = arith.constant 0 : i32
    %c0_i32_0 = arith.constant 0 : i32
    return %arg0, %c0_i32 : i32, i32
  }
  func.func @transform_3(%arg0: i32, %arg1: i32) -> (i32, i32, i32) {
    %c0_i32 = arith.constant 0 : i32
    %c0_i32_0 = arith.constant 0 : i32
    %c0_i32_1 = arith.constant 0 : i32
    return %arg0, %c0_i32, %c0_i32_0 : i32, i32, i32
  }
}

</mosaic_0001>

<llo_original>
// kernel: tpu_custom_call.1
$region0: #{tpu_custom_call.1}
  #allocation0 [shape = 'u32[]', space=smem, size = 0x4, offset = 0x4, fixed_abs, tag = 'smem constant byte address 0x4 - core index']
  #allocation1 [shape = 'u32[144,128]{1,0:T(1,128)}', space=vmem, size = 0x12000, scoped, tag = 'internal scratch']
  #allocation2 [shape = 'bf16[16,18]{1,0:T(16,128)(2,1)}', space=vmem, size = 0x1000, scoped, tag = 'scratch operand']
  #allocation3 [shape = 'f32[16,1]{1,0:T(8,128)}', space=vmem, size = 0x2000, scoped, tag = 'scratch operand']
  #allocation4 [shape = 'f32[16,1]{1,0:T(8,128)}', space=vmem, size = 0x2000, scoped, tag = 'scratch operand']
  #allocation5 [shape = 'f32[16,1]{1,0:T(8,128)}', space=vmem, size = 0x2000, scoped, tag = 'scratch operand']
  %s0 = inlined_call_operand.vmem [shape: f32[16,18], index: 0, kind: input, shape index: {}]
  %s1 = inlined_call_operand.hbm [shape: bf16[18,128], index: 1, kind: input, shape index: {}]
  %s2 = inlined_call_operand.vmem [shape: s32[16,1], index: 2, kind: input, shape index: {}]
  %s3 = inlined_call_operand.hbm [shape: f32[1,1,1], index: 3, kind: output, shape index: {}]
  %s4 = sld [smem:[#allocation0]]
  $region34: #{tpu_custom_call.1} parent=0
    _
  %s6 = ssub.s32 1, %s4
  %s7 = scalar_select 0, %s6, %s4
  $region1: #{tpu_custom_call.1} parent=0
    #allocation6 [shape = 'u8[6144]{0}', space=vmem, size = 0x1800, scoped, tag = 'input window, operand 1, single buffered']
    #allocation7 [shape = 's32[1]{0}', space=sflag, size = 0x4, scoped, tag = 'scoped memory for tpu_custom_call.1']
    #allocation8 [shape = 's32[1]{0}', space=sflag, size = 0x4, scoped, tag = 'scoped memory for tpu_custom_call.1']
    #allocation9 [shape = 'u8[512]{0}', space=vmem, size = 0x400, scoped, tag = 'output window, operand 0, single buffered']
    %8 = vsyncpa [#allocation7], 0
    %9 = vsyncpa [#allocation8], 0
    // Predicated region
    $region2: #{tpu_custom_call.1} parent=1 // pred_check
      _
    $region3: #{tpu_custom_call.1} parent=1 // pred_check_branch
      %11 = sbr.rel (0) target = $region5
    $region4: #{tpu_custom_call.1} parent=1 // pred_region
      _
    $region5: #{tpu_custom_call.1} parent=1 // pred_fallthru
      _
    // Predicated region
    $region6: #{tpu_custom_call.1} parent=1 // pred_check
      _
    $region7: #{tpu_custom_call.1} parent=1 // pred_check_branch
      %13 = sbr.rel (0) target = $region9
    $region8: #{tpu_custom_call.1} parent=1 // pred_region
      %s15 = ssub.s32 192, 192
      %16 = vsyncadd [#allocation7], %s15
      %s17 = sshll.u32 [#allocation6], 4
      %s18 = int_to_ptr.vmem [resolvable:$true] %s17
      %23 = dma.hbm_to_vmem [thread:$0]  %s1, 192, %s18, [#allocation7], 64, 64, 4
    $region9: #{tpu_custom_call.1} parent=1 // pred_fallthru
      _
    // Predicated region
    $region10: #{tpu_custom_call.1} parent=1 // pred_check
      _
    $region11: #{tpu_custom_call.1} parent=1 // pred_check_branch
      %25 = sbr.rel (0) target = $region13
    $region12: #{tpu_custom_call.1} parent=1 // pred_region
      _
    $region13: #{tpu_custom_call.1} parent=1 // pred_fallthru
      _
    // Predicated region
    $region14: #{tpu_custom_call.1} parent=1 // pred_check
      _
    $region15: #{tpu_custom_call.1} parent=1 // pred_check_branch
      %27 = sbr.rel (0) target = $region17
    $region16: #{tpu_custom_call.1} parent=1 // pred_region
      %28 = dma.done [#allocation7], 192
    $region17: #{tpu_custom_call.1} parent=1 // pred_fallthru
      _
    %p30 = scmp.eq.s32.totalorder 0, 0
    // Predicated region
    $region18: #{tpu_custom_call.1} parent=1 // pred_check
      %p31 = pneg %p30
    $region19: #{tpu_custom_call.1} parent=1 // pred_check_branch
      %33 = sbr.rel (%p31) target = $region21
    $region20: #{tpu_custom_call.1} parent=1 // pred_region
      %v34 = vld [vmem:[%s0] sm:$0xff]
      %v35 = vld [vmem:[%s0 + $0x8] sm:$0xff]
      %v36 = vmul.f32 %v34, %v34
      %v37 = vmul.f32 %v35, %v35
      %vm38 = vcmask 146432
      %v39 = vsel %vm38, %v36, 0.0
      %40 = vadd.xlane.f32.xlu0 %v39
      %v41 = vpop.xlane.xlu0 %40
      %v42 = vsel %vm38, %v37, 0.0
      %43 = vadd.xlane.f32.xlu0 %v42
      %v44 = vpop.xlane.xlu0 %43
      %v45 = vmax.f32 %v41, 1e-24
      %v46 = vmax.f32 %v44, 1e-24
      %v47 = vrsqrt.pop %v45
      %v48 = vrsqrt.pop %v46
      %v49 = vmul.f32 %v34, %v47
      %v50 = vmul.f32 %v35, %v48
      %v51 = vpack.c.bf16 %v50, %v49
      %52 = vst.msk [vmem:[#allocation2] sm:$0xff] %vm38, %v51
      %vm53 = vcmask 7168
      %54 = vst.msk [vmem:[#allocation3] sm:$0xff] %vm53, -1e+30
      %55 = vst.msk [vmem:[#allocation3 + $0x8] sm:$0xff] %vm53, -1e+30
      %56 = vst.msk [vmem:[#allocation4] sm:$0xff] %vm53, 0.0
      %57 = vst.msk [vmem:[#allocation4 + $0x8] sm:$0xff] %vm53, 0.0
      %58 = vst.msk [vmem:[#allocation5] sm:$0xff] %vm53, 0.0
      %59 = vst.msk [vmem:[#allocation5 + $0x8] sm:$0xff] %vm53, 0.0
    $region21: #{tpu_custom_call.1} parent=1 // pred_fallthru
      _
    %v60 = vld [vmem:[#allocation2] sm:$0xff]
    %v61 = vld [vmem:[#allocation6] sm:$0xf]
    %v62 = vld [vmem:[#allocation6 + $0x4] sm:$0xf]
    %v63 = vld [vmem:[#allocation6 + $0x8] sm:$0x1]
    %v67 = vunpack.c.l.b16 %v61
    %v68 = vunpack.c.l.b16 %v62
    %v69 = vunpack.c.l.b16 %v63
    %v70 = vpack.c.b16 %v68, %v67
    %v71 = vpack.c.b16 %v69, %v69
    %vm73 = vcmask 146432
    %v75 = vsel %vm73, %v60, 0
    %vm77 = vcmask 1040384
    %v79 = vsel %vm77, %v71, 0
    %81 = vmatprep.subr.bf16.mxu0 0
    %82 = vmatpush1.bf16.msra.mxu0 %v70
    %83 = vmatprep.subr.bf16.mxu0 0
    %84 = vmatpush1.bf16.msra.mxu0 %v79
    %85 = vmatprep.subr.bf16.mxu0 0
    %86 = vmatpush1.bf16.msra.mxu0 0
    %87 = vmatprep.subr.bf16.mxu0 0
    %88 = vmatpush1.bf16.msra.mxu0 0
    %89 = vmatprep.subr.bf16.mxu0 0
    %90 = vmatpush1.bf16.msra.mxu0 0
    %91 = vmatprep.subr.bf16.mxu0 0
    %92 = vmatpush1.bf16.msra.mxu0 0
    %93 = vmatprep.subr.bf16.mxu0 0
    %94 = vmatpush1.bf16.msra.mxu0 0
    %95 = vmatprep.subr.bf16.mxu0 0
    %96 = vmatpush1.bf16.msra.mxu0 0
    %97 = vmatprep.subr.bf16.mxu0 0
    %98 = vmatpush1.bf16.msra.mxu0 0
    %99 = vmatprep.subr.bf16.mxu0 0
    %100 = vmatpush1.bf16.msra.mxu0 0
    %101 = vmatprep.subr.bf16.mxu0 0
    %102 = vmatpush1.bf16.msra.mxu0 0
    %103 = vmatprep.subr.bf16.mxu0 0
    %104 = vmatpush1.bf16.msra.mxu0 0
    %105 = vmatprep.subr.bf16.mxu0 0
    %106 = vmatpush1.bf16.msra.mxu0 0
    %107 = vmatprep.subr.bf16.mxu0 0
    %108 = vmatpush1.bf16.msra.mxu0 0
    %109 = vmatprep.subr.bf16.mxu0 0
    %110 = vmatpush1.bf16.msra.mxu0 0
    %111 = vmatprep.subr.bf16.mxu0 0
    %112 = vmatpush1.bf16.msra.mxu0 0
    %113 = vmatprep.mubr.bf16.mxu0 0
    %114 = vmatmul.mubr.bf16.gmra.mrb[0].mxu0 %v75
    %v115 = vpop.f32.mrb[0].mxu0
    %v116 = vadd.f32 0.0, %v115
    %v117 = vpop.f32.mrb[0].mxu0
    %v118 = vpop.f32.mrb[0].mxu0
    %v119 = vadd.f32 0.0, %v118
    %v120 = vpop.f32.mrb[0].mxu0
    %121 = vdwg.mxu0
    %v122 = vld [vmem:[%s2] sm:$0xff]
    %v123 = vld [vmem:[%s2 + $0x8] sm:$0xff]
    %s124 = smul.u32 0, 128
    %v125 = vlaneseq
    %v126 = vand.u32 %v125, 127
    %v127 = vstv %s124
    %v128 = vadd.s32 %v127, %v126
    %129 = vset.pattern.permute.xlu0 0
    %130 = vperm.xlu0 %129, %v122
    %v131 = vpop.permute.xlu0 %130
    %132 = vset.pattern.permute.xlu0 0
    %133 = vperm.xlu0 %132, %v123
    %v134 = vpop.permute.xlu0 %133
    %vm135 = vcmp.eq.s32.totalorder %v128, %v131
    %vm136 = vcmp.eq.s32.totalorder %v128, %v134
    %v137 = vsel %vm135, %v116, 0.0
    %v138 = vsel %vm136, %v119, 0.0
    %139 = vadd.xlane.f32.xlu0 %v137
    %v140 = vpop.xlane.xlu0 %139
    %141 = vadd.xlane.f32.xlu0 %v138
    %v142 = vpop.xlane.xlu0 %141
    %v143 = vmul.f32 %v140, %v140
    %v144 = vmul.f32 %v142, %v142
    %v145 = vsub.f32 1.0, %v143
    %v146 = vsub.f32 1.0, %v144
    %v147 = vmax.f32 %v145, 0.0
    %v148 = vmax.f32 %v146, 0.0
    %v149 = vmin.f32 %v147, 1.0
    %v150 = vmin.f32 %v148, 1.0
    %v151 = vrsqrt.pop %v149
    %v152 = vmul.f32 %v149, %v151
    %vm153 = vcmp.eq.f32.partialorder %v149, inf
    %v154 = vsel %vm153, %v149, %v152
    %vm155 = vcmp.eq.f32.partialorder %v149, 0.0
    %v156 = vand.u32 %v149, 2147483648
    %v157 = vsel %vm155, %v156, %v154
    %v158 = vrsqrt.pop %v150
    %v159 = vmul.f32 %v150, %v158
    %vm160 = vcmp.eq.f32.partialorder %v150, inf
    %v161 = vsel %vm160, %v150, %v159
    %vm162 = vcmp.eq.f32.partialorder %v150, 0.0
    %v163 = vand.u32 %v150, 2147483648
    %v164 = vsel %vm162, %v163, %v161
    %v165 = vmul.f32 %v140, 0.87758255
    %v166 = vmul.f32 %v142, 0.87758255
    %v167 = vmul.f32 %v157, 0.47942555
    %v168 = vmul.f32 %v164, 0.47942555
    %v169 = vsub.f32 %v165, %v167
    %v170 = vsub.f32 %v166, %v168
    %v171 = vsub.f32 %v140, -0.87758255
    %v172 = vsub.f32 %v142, -0.87758255
    %vm173 = vcmp.gt.f32.partialorder %v171, 0.0
    %vm174 = vcmp.gt.f32.partialorder %v172, 0.0
    %v175 = vsub.f32 %v140, 0.23971277
    %v176 = vsub.f32 %v142, 0.23971277
    %v177 = vsel %vm173, %v169, %v175
    %v178 = vsel %vm174, %v170, %v176
    %v179 = vsel %vm135, %v177, %v116
    %v180 = vsel %vm136, %v178, %v119
    %v181 = vmul.f32 %v179, 64.0
    %v182 = vmul.f32 %v180, 64.0
    %vm183 = vcmp.lt.s32.totalorder %v128, 18
    %v184 = vsel %vm183, %v181, -1e+30
    %v185 = vsel %vm183, %v182, -1e+30
    %v186 = vld [vmem:[#allocation3] sm:$0xff]
    %v187 = vld [vmem:[#allocation3 + $0x8] sm:$0xff]
    %188 = vmax.xlane.f32.xlu0 %v184
    %v189 = vpop.xlane.xlu0 %188
    %190 = vmax.xlane.f32.xlu0 %v185
    %v191 = vpop.xlane.xlu0 %190
    %v192 = vmax.f32 %v186, %v189
    %v193 = vmax.f32 %v187, %v191
    %v194 = vsub.f32 %v186, %v192
    %v195 = vsub.f32 %v187, %v193
    %v196 = vmul.f32 %v194, 1.442695
    %v197 = vpow.pop %v196
    %v198 = vmul.f32 %v195, 1.442695
    %v199 = vpow.pop %v198
    %v200 = vld [vmem:[#allocation4] sm:$0xff]
    %v201 = vld [vmem:[#allocation4 + $0x8] sm:$0xff]
    %v202 = vmul.f32 %v200, %v197
    %v203 = vmul.f32 %v201, %v199
    %205 = vset.pattern.permute.xlu0 0
    %206 = vperm.xlu0 %205, %v192
    %v207 = vpop.permute.xlu0 %206
    %210 = vset.pattern.permute.xlu0 0
    %211 = vperm.xlu0 %210, %v193
    %v212 = vpop.permute.xlu0 %211
    %v214 = vsub.f32 %v184, %v207
    %v215 = vsub.f32 %v185, %v212
    %v216 = vmul.f32 %v214, 1.442695
    %v217 = vpow.pop %v216
    %v218 = vmul.f32 %v215, 1.442695
    %v219 = vpow.pop %v218
    %220 = vadd.xlane.f32.xlu0 %v217
    %v221 = vpop.xlane.xlu0 %220
    %222 = vadd.xlane.f32.xlu0 %v219
    %v223 = vpop.xlane.xlu0 %222
    %v224 = vadd.f32 %v202, %v221
    %v225 = vadd.f32 %v203, %v223
    %vm226 = vcmask 7168
    %227 = vst.msk [vmem:[#allocation4] sm:$0xff] %vm226, %v224
    %228 = vst.msk [vmem:[#allocation4 + $0x8] sm:$0xff] %vm226, %v225
    %229 = vst.msk [vmem:[#allocation3] sm:$0xff] %vm226, %v192
    %230 = vst.msk [vmem:[#allocation3 + $0x8] sm:$0xff] %vm226, %v193
    %vm231 = vcmp.ge.s32.totalorder %v122, %v127
    %vm232 = vcmp.ge.s32.totalorder %v123, %v127
    %s233 = sadd.s32 0, 1
    %s234 = smul.u32 %s233, 128
    %v235 = vstv %s234
    %vm236 = vcmp.lt.s32.totalorder %v122, %v235
    %vm237 = vcmp.lt.s32.totalorder %v123, %v235
    %vm238 = vmand %vm231, %vm236
    %vm239 = vmand %vm232, %vm237
    %v240 = vld [vmem:[#allocation5] sm:$0xff]
    %v241 = vld [vmem:[#allocation5 + $0x8] sm:$0xff]
    %v242 = vmul.f32 %v177, 64.0
    %v243 = vmul.f32 %v178, 64.0
    %v244 = vsel %vm238, %v242, 0.0
    %v245 = vsel %vm239, %v243, 0.0
    %v246 = vadd.f32 %v240, %v244
    %v247 = vadd.f32 %v241, %v245
    %248 = vst.msk [vmem:[#allocation5] sm:$0xff] %vm226, %v246
    %249 = vst.msk [vmem:[#allocation5 + $0x8] sm:$0xff] %vm226, %v247
    // Predicated region
    $region22: #{tpu_custom_call.1} parent=1 // pred_check
      %p250 = pneg %p30
    $region23: #{tpu_custom_call.1} parent=1 // pred_check_branch
      %252 = sbr.rel (%p250) target = $region25
    $region24: #{tpu_custom_call.1} parent=1 // pred_region
      %v253 = vlaneseq
      %v254 = vshrl.u32 %v253, 7
      %v255 = vadd.s32 %v254, 8
      %s256 = smul.u32 0, 16
      %v257 = vstv %s256
      %v258 = vadd.s32 %v257, %v254
      %v259 = vadd.s32 %v257, %v255
      %vm260 = vcmp.lt.s32.totalorder %v258, 4
      %vm261 = vcmp.lt.s32.totalorder %v259, 4
      %v262 = vld [vmem:[#allocation3] sm:$0xff]
      %v263 = vld [vmem:[#allocation3 + $0x8] sm:$0xff]
      %v264 = vld [vmem:[#allocation4] sm:$0xff]
      %v265 = vld [vmem:[#allocation4 + $0x8] sm:$0xff]
      %v266 = vlog2.pop %v264
      %v267 = vmul.f32 %v266, 0.6931472
      %v268 = vlog2.pop %v265
      %v269 = vmul.f32 %v268, 0.6931472
      %v270 = vadd.f32 %v262, %v267
      %v271 = vadd.f32 %v263, %v269
      %v272 = vld [vmem:[#allocation5] sm:$0xff]
      %v273 = vld [vmem:[#allocation5 + $0x8] sm:$0xff]
      %v274 = vsub.f32 %v270, %v272
      %v275 = vsub.f32 %v271, %v273
      %v276 = vsel %vm260, %v274, 0.0
      %v277 = vsel %vm261, %v275, 0.0
      %v278 = vsel %vm226, %v276, 0.0
      %v279 = vsel %vm226, %v277, 0.0
      %v280 = vadd.f32 %v278, %v279
      %v281 = vrot.slane %v280, 4
      %v282 = vadd.f32 %v280, %v281
      %v283 = vrot.slane %v282, 2
      %v284 = vadd.f32 %v282, %v283
      %v285 = vrot.slane %v284, 1
      %v286 = vadd.f32 %v284, %v285
      %vm287 = vcmask 0
      %288 = vst.msk [vmem:[#allocation9] sm:$0x1] %vm287, %v286
    $region25: #{tpu_custom_call.1} parent=1 // pred_fallthru
      _
    // Predicated region
    $region26: #{tpu_custom_call.1} parent=1 // pred_check
      _
    $region27: #{tpu_custom_call.1} parent=1 // pred_check_branch
      %290 = sbr.rel (0) target = $region29
    $region28: #{tpu_custom_call.1} parent=1 // pred_region
      %s292 = ssub.s32 16, 16
      %293 = vsyncadd [#allocation8], %s292
      %s295 = sshll.u32 [#allocation9], 4
      %s296 = int_to_ptr.vmem [resolvable:$true] %s295
      %298 = dma.vmem_to_hbm [thread:$0]  %s296, 16, %s3, [#allocation8]
    $region29: #{tpu_custom_call.1} parent=1 // pred_fallthru
      _
    // Predicated region
    $region30: #{tpu_custom_call.1} parent=1 // pred_check
      _
    $region31: #{tpu_custom_call.1} parent=1 // pred_check_branch
      %300 = sbr.rel (0) target = $region33
    $region32: #{tpu_custom_call.1} parent=1 // pred_region
      %301 = dma.done [#allocation8], 16
    $region33: #{tpu_custom_call.1} parent=1 // pred_fallthru
      _
    %302 = vsyncpa [#allocation7], 1
    %303 = vsyncpa [#allocation8], 1

</llo_original>
